<compile_context>
chip_gen: v6e
topology: v6e:2x2x1
jax: 0.10.0
libtpu: 0.0.40
codegen_flags: <defaults>
</compile_context>

<pallas_src>
import jax
import jax.numpy as jnp
from jax import lax
from jax.experimental import pallas as pl
from jax.experimental.pallas import tpu as pltpu

_LANES = 128
_MAX_TILE_ROWS = 4096  # 4096 * 128 * 4 B = 2 MiB per f32 input tile


def _tile_plan(rows: int):
    """Pick (tile_r, acc_rows, num_tiles, need_mask) for a plane of `rows` x 128."""
    if rows >= 8:
        tile_r = min(_MAX_TILE_ROWS, (rows // 8) * 8)   # multiple of 8, <= rows
        acc_rows = 8
    else:
        tile_r = rows                                    # block == full dim (legal)
        acc_rows = rows
    num_tiles = -(-rows // tile_r)                       # cdiv
    need_mask = (rows % tile_r) != 0
    return tile_r, acc_rows, num_tiles, need_mask


def _make_fore_dice_kernel(tile_r: int, acc_rows: int, valid_rows: int, need_mask: bool):
    groups = tile_r // acc_rows

    def tree(x):
        # (tile_r, 128) -> (acc_rows, 128): leading-axis sum = pure vreg adds (VALU).
        if groups == 1:
            return x
        return jnp.sum(x.reshape(groups, acc_rows, _LANES), axis=0)

    def kernel(pr_ref, gt_ref, inter_ref, card_ref, fg_ref):
        # pr_ref : (tile_r, 128) class-1 probabilities, wire dtype
        # gt_ref : (tile_r, 128) integer labels, wire dtype
        # *_ref  : (acc_rows, 128) f32 per-plane partial sums (resident across t)
        t = pl.program_id(1)

        @pl.when(t == 0)
        def _init():
            inter_ref[...] = jnp.zeros_like(inter_ref)
            card_ref[...] = jnp.zeros_like(card_ref)
            fg_ref[...] = jnp.zeros_like(fg_ref)

        pr1 = pr_ref[...].astype(jnp.float32)           # upcast only in-kernel
        gt1 = (gt_ref[...] == 1).astype(jnp.float32)    # foreground mask

        if need_mask:
            # Mask the garbage rows of a partial last tile (zeros are neutral to all sums).
            row_ids = t * tile_r + lax.broadcasted_iota(jnp.int32, (tile_r, _LANES), 0)
            in_bounds = row_ids < valid_rows
            pr1 = jnp.where(in_bounds, pr1, 0.0)
            gt1 = jnp.where(in_bounds, gt1, 0.0)

        tp = tree(pr1)
        tg = tree(gt1)
        ti = tree(pr1 * gt1)

        inter_ref[...] += ti
        card_ref[...] += tp + tg        # card accumulator folds the pr sum
        fg_ref[...] += tg               # needed for the (sum gt1 > 0) gate

    return kernel


def arrowfcn_fore_dice_metric(pr, gt):
    """pr: (N, C, H, W) class probabilities (from_logits=False); gt: (N, H, W) labels.

    pr may be float32 or bfloat16, gt any integer dtype (int8/uint8/int32); narrower
    wire dtypes reduce HBM traffic and the kernel upcasts/compares internally.
    Returns the scalar metric 1 - DiceLoss('multiclass', classes=[1])(pr, gt).
    """
    N, C, H, W = pr.shape
    assert gt.shape == (N, H, W)
    hw = H * W

    if hw % _LANES == 0:
        # Lane-dense views; contiguous row-major reshape is free.  Class-1 plane is
        # selected by the BlockSpec index_map, so only 1x plane traffic from HBM.
        rows = hw // _LANES
        pr_in = pr.reshape(N, C, rows, _LANES)
        gt_in = gt.reshape(N, rows, _LANES)
        channel = 1
        n_planes = N
    else:
        # TODO(synk): handle H*W % 128 != 0 natively ((tile_h, W) blocks + masked tail)
        # instead of this extra slice+pad pass over HBM.
        flat_pr = pr[:, 1, :, :].reshape(-1)
        flat_gt = gt.reshape(-1)
        pad = (-flat_pr.shape[0]) % _LANES
        flat_pr = jnp.pad(flat_pr, (0, pad))
        flat_gt = jnp.pad(flat_gt, (0, pad))
        rows = flat_pr.shape[0] // _LANES
        pr_in = flat_pr.reshape(1, 1, rows, _LANES)
        gt_in = flat_gt.reshape(1, rows, _LANES)
        channel = 0
        n_planes = 1

    tile_r, acc_rows, num_tiles, need_mask = _tile_plan(rows)
    kernel = _make_fore_dice_kernel(tile_r, acc_rows, rows, need_mask)

    part_shape = jax.ShapeDtypeStruct((n_planes, acc_rows, _LANES), jnp.float32)
    part_spec = pl.BlockSpec((None, acc_rows, _LANES), lambda n, t: (n, 0, 0))

    inter_p, card_p, fg_p = pl.pallas_call(
        kernel,
        out_shape=(part_shape, part_shape, part_shape),
        grid_spec=pltpu.PrefetchScalarGridSpec(
            num_scalar_prefetch=0,
            grid=(n_planes, num_tiles),
            in_specs=[
                # N and C dims squeezed; the C block index selects the class-1 plane.
                pl.BlockSpec((None, None, tile_r, _LANES),
                             lambda n, t: (n, channel, t, 0)),
                pl.BlockSpec((None, tile_r, _LANES),
                             lambda n, t: (n, t, 0)),
            ],
            out_specs=(part_spec, part_spec, part_spec),
        ),
        compiler_params=pltpu.CompilerParams(
            # Plane axis is truly parallel (independent per-plane partial outputs),
            # so v7x megacore can shard planes across its two TensorCores.
            dimension_semantics=("parallel", "arbitrary"),
            vmem_limit_bytes=32 * 1024 * 1024,
        ),
    )(pr_in, gt_in)

    # Tiny epilogue (a few KiB of partials): combine and apply the dice formula.
    inter = jnp.sum(inter_p)
    card = jnp.sum(card_p)
    fg = jnp.sum(fg_p)
    eps = jnp.float32(1e-7)
    score = (2.0 * inter) / jnp.maximum(card, eps)
    loss = (1.0 - score) * (fg > 0).astype(jnp.float32)
    return (1.0 - loss).astype(jnp.float32)


def _reference(pr, gt):
    """Pure-JAX reference of smp DiceLoss(classes=[1]) + metric, for sanity."""
    pr1 = pr[:, 1, :, :].astype(jnp.float32)
    gt1 = (gt == 1).astype(jnp.float32)
    inter = jnp.sum(pr1 * gt1)
    card = jnp.sum(pr1 + gt1)
    score = 2.0 * inter / jnp.maximum(card, 1e-7)
    loss = (1.0 - score) * (jnp.sum(gt1) > 0).astype(jnp.float32)
    return 1.0 - loss


if __name__ == "__main__":
    key = jax.random.PRNGKey(0)
    keys = jax.random.split(key, 8)

    # 1) Lane-dense path (H*W % 128 == 0), tiny plane (rows < 8, block == full dim).
    N, C, H, W = 2, 2, 16, 16
    pr = jax.nn.softmax(jax.random.normal(keys[0], (N, C, H, W), jnp.float32), axis=1)
    gt = jax.random.bernoulli(keys[1], 0.3, (N, H, W)).astype(jnp.int32)
    out = jax.block_until_ready(arrowfcn_fore_dice_metric(pr, gt))
    ref = _reference(pr, gt)
    assert jnp.allclose(out, ref, atol=1e-5, rtol=1e-5), (out, ref)

    # 2) Lane-dense path with a masked partial last row-tile (rows=18, tile_r=16).
    N2, C2, H2, W2 = 1, 3, 48, 48
    pr2 = jax.nn.softmax(jax.random.normal(keys[2], (N2, C2, H2, W2), jnp.float32), axis=1)
    gt2 = jax.random.randint(keys[3], (N2, H2, W2), 0, C2).astype(jnp.int32)
    out2 = jax.block_until_ready(arrowfcn_fore_dice_metric(pr2, gt2))
    ref2 = _reference(pr2, gt2)
    assert jnp.allclose(out2, ref2, atol=1e-5, rtol=1e-5), (out2, ref2)

    # 3) Narrow wire dtypes (bf16 probabilities, int8 labels), tree-sum path (groups=4).
    N3, C3, H3, W3 = 2, 2, 64, 64
    pr3 = jax.nn.softmax(jax.random.normal(keys[4], (N3, C3, H3, W3), jnp.float32),
                         axis=1).astype(jnp.bfloat16)
    gt3 = jax.random.bernoulli(keys[5], 0.3, (N3, H3, W3)).astype(jnp.int8)
    out3 = jax.block_until_ready(arrowfcn_fore_dice_metric(pr3, gt3))
    ref3 = _reference(pr3, gt3)
    assert jnp.allclose(out3, ref3, atol=1e-3, rtol=1e-3), (out3, ref3)

    # 4) Fallback path (H*W not a multiple of 128).
    N4, C4, H4, W4 = 2, 2, 16, 12
    pr4 = jax.nn.softmax(jax.random.normal(keys[6], (N4, C4, H4, W4), jnp.float32), axis=1)
    gt4 = jax.random.bernoulli(keys[7], 0.3, (N4, H4, W4)).astype(jnp.int32)
    out4 = jax.block_until_ready(arrowfcn_fore_dice_metric(pr4, gt4))
    ref4 = _reference(pr4, gt4)
    assert jnp.allclose(out4, ref4, atol=1e-5, rtol=1e-5), (out4, ref4)

    print("KERNEL_OK")
</pallas_src>

<mosaic_0001>
module attributes {stable_mosaic.version = 11 : i64} {
  func.func @kernel(%arg0: i32, %arg1: i32, %arg2: memref<1x1x2x128xf32, #tpu.memory_space<vmem>>, %arg3: memref<1x2x128xi32, #tpu.memory_space<vmem>>, %arg4: memref<1x2x128xf32, #tpu.memory_space<vmem>>, %arg5: memref<1x2x128xf32, #tpu.memory_space<vmem>>, %arg6: memref<1x2x128xf32, #tpu.memory_space<vmem>>) attributes {dimension_semantics = [#tpu.dimension_semantics<parallel>, #tpu.dimension_semantics<arbitrary>], iteration_bounds = array<i64: 2, 1>, scalar_prefetch = 0 : i64, scratch_operands = 0 : i64, tpu.core_type = #tpu.core_type<tc>, window_params = [{transform_indices = @transform_0, window_bounds = array<i64: 1, 1, 2, 128>}, {transform_indices = @transform_1, window_bounds = array<i64: 1, 2, 128>}, {transform_indices = @transform_2, window_bounds = array<i64: 1, 2, 128>}, {transform_indices = @transform_3, window_bounds = array<i64: 1, 2, 128>}, {transform_indices = @transform_4, window_bounds = array<i64: 1, 2, 128>}]} {
    %c0_i32 = arith.constant 0 : i32
    %0 = arith.cmpi eq, %arg1, %c0_i32 : i32
    %1 = arith.extui %0 : i1 to i32
    %c0_i32_0 = arith.constant 0 : i32
    %2 = arith.cmpi ne, %1, %c0_i32_0 : i32
    scf.if %2 {
      %cst = arith.constant 0.000000e+00 : f32
      %31 = vector.broadcast %cst : f32 to vector<2x128xf32>
      %c0_25 = arith.constant 0 : index
      %c0_26 = arith.constant 0 : index
      %c0_27 = arith.constant 0 : index
      %32 = vector.load %arg4[%c0_25, %c0_26, %c0_27] : memref<1x2x128xf32, #tpu.memory_space<vmem>>, vector<1x2x128xf32>
      %33 = vector.shape_cast %32 : vector<1x2x128xf32> to vector<2x128xf32>
      %34 = vector.shape_cast %31 : vector<2x128xf32> to vector<1x2x128xf32>
      tpu.vector_store %arg4[%c0_25, %c0_26, %c0_27], %34 {strides = array<i32>} : memref<1x2x128xf32, #tpu.memory_space<vmem>>, vector<1x2x128xf32>,
      %cst_28 = arith.constant 0.000000e+00 : f32
      %35 = vector.broadcast %cst_28 : f32 to vector<2x128xf32>
      %c0_29 = arith.constant 0 : index
      %c0_30 = arith.constant 0 : index
      %c0_31 = arith.constant 0 : index
      %36 = vector.load %arg5[%c0_29, %c0_30, %c0_31] : memref<1x2x128xf32, #tpu.memory_space<vmem>>, vector<1x2x128xf32>
      %37 = vector.shape_cast %36 : vector<1x2x128xf32> to vector<2x128xf32>
      %38 = vector.shape_cast %35 : vector<2x128xf32> to vector<1x2x128xf32>
      tpu.vector_store %arg5[%c0_29, %c0_30, %c0_31], %38 {strides = array<i32>} : memref<1x2x128xf32, #tpu.memory_space<vmem>>, vector<1x2x128xf32>,
      %cst_32 = arith.constant 0.000000e+00 : f32
      %39 = vector.broadcast %cst_32 : f32 to vector<2x128xf32>
      %c0_33 = arith.constant 0 : index
      %c0_34 = arith.constant 0 : index
      %c0_35 = arith.constant 0 : index
      %40 = vector.load %arg6[%c0_33, %c0_34, %c0_35] : memref<1x2x128xf32, #tpu.memory_space<vmem>>, vector<1x2x128xf32>
      %41 = vector.shape_cast %40 : vector<1x2x128xf32> to vector<2x128xf32>
      %42 = vector.shape_cast %39 : vector<2x128xf32> to vector<1x2x128xf32>
      tpu.vector_store %arg6[%c0_33, %c0_34, %c0_35], %42 {strides = array<i32>} : memref<1x2x128xf32, #tpu.memory_space<vmem>>, vector<1x2x128xf32>,
    } else {
    }
    %c0 = arith.constant 0 : index
    %c0_1 = arith.constant 0 : index
    %c0_2 = arith.constant 0 : index
    %c0_3 = arith.constant 0 : index
    %3 = vector.load %arg2[%c0, %c0_1, %c0_2, %c0_3] : memref<1x1x2x128xf32, #tpu.memory_space<vmem>>, vector<1x1x2x128xf32>
    %4 = vector.shape_cast %3 : vector<1x1x2x128xf32> to vector<2x128xf32>
    %c0_4 = arith.constant 0 : index
    %c0_5 = arith.constant 0 : index
    %c0_6 = arith.constant 0 : index
    %5 = vector.load %arg3[%c0_4, %c0_5, %c0_6] : memref<1x2x128xi32, #tpu.memory_space<vmem>>, vector<1x2x128xi32>
    %6 = vector.shape_cast %5 : vector<1x2x128xi32> to vector<2x128xi32>
    %c1_i32 = arith.constant 1 : i32
    %7 = vector.broadcast %c1_i32 : i32 to vector<2x128xi32>
    %8 = arith.cmpi eq, %6, %7 : vector<2x128xi32>
    %9 = arith.extui %8 : vector<2x128xi1> to vector<2x128xi32>
    %10 = arith.sitofp %9 : vector<2x128xi32> to vector<2x128xf32>
    %11 = arith.mulf %4, %10 : vector<2x128xf32>
    %c0_7 = arith.constant 0 : index
    %c0_8 = arith.constant 0 : index
    %c0_9 = arith.constant 0 : index
    %12 = vector.load %arg4[%c0_7, %c0_8, %c0_9] : memref<1x2x128xf32, #tpu.memory_space<vmem>>, vector<1x2x128xf32>
    %13 = vector.shape_cast %12 : vector<1x2x128xf32> to vector<2x128xf32>
    %14 = arith.addf %13, %11 : vector<2x128xf32>
    %c0_10 = arith.constant 0 : index
    %c0_11 = arith.constant 0 : index
    %c0_12 = arith.constant 0 : index
    %15 = vector.load %arg4[%c0_10, %c0_11, %c0_12] : memref<1x2x128xf32, #tpu.memory_space<vmem>>, vector<1x2x128xf32>
    %16 = vector.shape_cast %15 : vector<1x2x128xf32> to vector<2x128xf32>
    %17 = vector.shape_cast %14 : vector<2x128xf32> to vector<1x2x128xf32>
    tpu.vector_store %arg4[%c0_10, %c0_11, %c0_12], %17 {strides = array<i32>} : memref<1x2x128xf32, #tpu.memory_space<vmem>>, vector<1x2x128xf32>,
    %c0_13 = arith.constant 0 : index
    %c0_14 = arith.constant 0 : index
    %c0_15 = arith.constant 0 : index
    %18 = vector.load %arg5[%c0_13, %c0_14, %c0_15] : memref<1x2x128xf32, #tpu.memory_space<vmem>>, vector<1x2x128xf32>
    %19 = vector.shape_cast %18 : vector<1x2x128xf32> to vector<2x128xf32>
    %20 = arith.addf %4, %10 : vector<2x128xf32>
    %21 = arith.addf %19, %20 : vector<2x128xf32>
    %c0_16 = arith.constant 0 : index
    %c0_17 = arith.constant 0 : index
    %c0_18 = arith.constant 0 : index
    %22 = vector.load %arg5[%c0_16, %c0_17, %c0_18] : memref<1x2x128xf32, #tpu.memory_space<vmem>>, vector<1x2x128xf32>
    %23 = vector.shape_cast %22 : vector<1x2x128xf32> to vector<2x128xf32>
    %24 = vector.shape_cast %21 : vector<2x128xf32> to vector<1x2x128xf32>
    tpu.vector_store %arg5[%c0_16, %c0_17, %c0_18], %24 {strides = array<i32>} : memref<1x2x128xf32, #tpu.memory_space<vmem>>, vector<1x2x128xf32>,
    %c0_19 = arith.constant 0 : index
    %c0_20 = arith.constant 0 : index
    %c0_21 = arith.constant 0 : index
    %25 = vector.load %arg6[%c0_19, %c0_20, %c0_21] : memref<1x2x128xf32, #tpu.memory_space<vmem>>, vector<1x2x128xf32>
    %26 = vector.shape_cast %25 : vector<1x2x128xf32> to vector<2x128xf32>
    %27 = arith.addf %26, %10 : vector<2x128xf32>
    %c0_22 = arith.constant 0 : index
    %c0_23 = arith.constant 0 : index
    %c0_24 = arith.constant 0 : index
    %28 = vector.load %arg6[%c0_22, %c0_23, %c0_24] : memref<1x2x128xf32, #tpu.memory_space<vmem>>, vector<1x2x128xf32>
    %29 = vector.shape_cast %28 : vector<1x2x128xf32> to vector<2x128xf32>
    %30 = vector.shape_cast %27 : vector<2x128xf32> to vector<1x2x128xf32>
    tpu.vector_store %arg6[%c0_22, %c0_23, %c0_24], %30 {strides = array<i32>} : memref<1x2x128xf32, #tpu.memory_space<vmem>>, vector<1x2x128xf32>,
    return
  }
  func.func @transform_0(%arg0: i32, %arg1: i32) -> (i32, i32, i32, i32) {
    %c1_i32 = arith.constant 1 : i32
    %c0_i32 = arith.constant 0 : i32
    %c0_i32_0 = arith.constant 0 : i32
    return %arg0, %c1_i32, %arg1, %c0_i32 : i32, i32, i32, i32
  }
  func.func @transform_1(%arg0: i32, %arg1: i32) -> (i32, i32, i32) {
    %c0_i32 = arith.constant 0 : i32
    %c0_i32_0 = arith.constant 0 : i32
    return %arg0, %arg1, %c0_i32 : i32, i32, i32
  }
  func.func @transform_2(%arg0: i32, %arg1: i32) -> (i32, i32, i32) {
    %c0_i32 = arith.constant 0 : i32
    %c0_i32_0 = arith.constant 0 : i32
    %c0_i32_1 = arith.constant 0 : i32
    return %arg0, %c0_i32, %c0_i32_0 : i32, i32, i32
  }
  func.func @transform_3(%arg0: i32, %arg1: i32) -> (i32, i32, i32) {
    %c0_i32 = arith.constant 0 : i32
    %c0_i32_0 = arith.constant 0 : i32
    %c0_i32_1 = arith.constant 0 : i32
    return %arg0, %c0_i32, %c0_i32_0 : i32, i32, i32
  }
  func.func @transform_4(%arg0: i32, %arg1: i32) -> (i32, i32, i32) {
    %c0_i32 = arith.constant 0 : i32
    %c0_i32_0 = arith.constant 0 : i32
    %c0_i32_1 = arith.constant 0 : i32
    return %arg0, %c0_i32, %c0_i32_0 : i32, i32, i32
  }
}

</mosaic_0001>

<llo_original>
// kernel: tpu_custom_call.1
$region0: #{tpu_custom_call.1}
  #allocation0 [shape = 'u32[]', space=smem, size = 0x4, offset = 0x4, fixed_abs, tag = 'smem constant byte address 0x4 - core index']
  #allocation1 [shape = 'u32[144,128]{1,0:T(1,128)}', space=vmem, size = 0x12000, scoped, tag = 'internal scratch']
  %s0 = inlined_call_operand.hbm [shape: f32[2,2,2,128], index: 0, kind: input, shape index: {}]
  %s1 = inlined_call_operand.hbm [shape: s32[2,2,128], index: 1, kind: input, shape index: {}]
  %s2 = inlined_call_operand.hbm [shape: f32[2,2,128], index: 2, kind: output, shape index: {0}]
  %s3 = inlined_call_operand.hbm [shape: f32[2,2,128], index: 3, kind: output, shape index: {1}]
  %s4 = inlined_call_operand.hbm [shape: f32[2,2,128], index: 4, kind: output, shape index: {2}]
  %5 = xla_tuple %s2, %s3, %s4
  %s6 = sld [smem:[#allocation0]]
  $region69: #{tpu_custom_call.1} parent=0
    _
  %s8 = ssub.s32 1, %s6
  %s9 = scalar_select 0, %s8, %s6
  $region1: #{tpu_custom_call.1} parent=0
    #allocation2 [shape = 'u8[2048]{0}', space=vmem, size = 0x800, scoped, tag = 'input window, operand 0']
    #allocation3 [shape = 's32[2]{0}', space=sflag, size = 0x8, scoped, tag = 'scoped memory for tpu_custom_call.1']
    #allocation4 [shape = 's32[2]{0}', space=sflag, size = 0x8, scoped, tag = 'scoped memory for tpu_custom_call.1']
    #allocation5 [shape = 'u8[2048]{0}', space=vmem, size = 0x800, scoped, tag = 'input window, operand 1']
    #allocation6 [shape = 's32[2]{0}', space=sflag, size = 0x8, scoped, tag = 'scoped memory for tpu_custom_call.1']
    #allocation7 [shape = 'u8[2048]{0}', space=vmem, size = 0x800, scoped, tag = 'output window, operand 0']
    #allocation8 [shape = 'u8[2048]{0}', space=vmem, size = 0x800, scoped, tag = 'output window, operand 1']
    #allocation9 [shape = 's32[2]{0}', space=sflag, size = 0x8, scoped, tag = 'scoped memory for tpu_custom_call.1']
    #allocation10 [shape = 'u8[2048]{0}', space=vmem, size = 0x800, scoped, tag = 'output window, operand 2']
    %10 = vsyncpa [#allocation3], 0
    %s11 = scalar_lea.sflag [#allocation3], 1
    %12 = vsyncpa %s11, 0
    %13 = vsyncpa [#allocation6], 0
    %s14 = scalar_lea.sflag [#allocation6], 1
    %15 = vsyncpa %s14, 0
    %16 = vsyncpa [#allocation4], 0
    %s17 = scalar_lea.sflag [#allocation4], 1
    %18 = vsyncpa %s17, 0
    %19 = vsyncpa [#allocation9], 0
    %s20 = scalar_lea.sflag [#allocation9], 1
    %21 = vsyncpa %s20, 0
    loop: start=0, step=1, limit=4
    $region2: #{tpu_custom_call.1} parent=1 // loop_pre_header
      _
    $region3: #{tpu_custom_call.1} parent=1 // loop_header
      %s23 = sphi 0, %s27
      %p24 = scmp.ge.s32.totalorder %s23, 4
      %s30 = sphi 0, %s42
      %s31 = sphi 0, %s38
      %s32 = sphi 0, %s30
      %s33 = sphi 0, %s31
      %s34 = sphi 0, %s32
      %s35 = sphi 0, %s33
      %s47 = sphi 0, %s49
      %s50 = sphi 0, %s47
      %s51 = sphi 0, %s50
      %s67 = sphi 0, %s51
      %s75 = sphi 0, %s77
      %s78 = sphi 0, %s75
      %s79 = sphi 0, %s78
      %s95 = sphi 0, %s79
      %s101 = sphi 0, %s103
      %s104 = sphi 0, %s101
      %s105 = sphi 0, %s104
      %s121 = sphi 0, %s105
      %s127 = sphi 0, %s129
      %s130 = sphi 0, %s127
      %s131 = sphi 0, %s130
      %s147 = sphi 0, %s131
      %s153 = sphi 0, %s155
      %s156 = sphi 0, %s153
      %s157 = sphi 0, %s156
      %s173 = sphi 0, %s157
    $region4: #{tpu_custom_call.1} parent=1 // loop_header_branch
      %26 = sbr.rel (%p24) target = $region8
    $region5: #{tpu_custom_call.1} parent=1 // loop_body
      %s28 = ssub.s32 %s23, 1
      %s29 = ssub.s32 %s23, 2
      %s36 = sadd.s32 1, %s31
      %p37 = scmp.ge.s32.totalorder %s36, 1
      %s38 = scalar_select %p37, 0, %s36
      %s39 = sadd.s32 1, %s30
      %s40 = scalar_select %p37, %s39, %s30
      %p41 = scmp.ge.s32.totalorder %s40, 2
      %s42 = scalar_select %p41, 0, %s40
      %s43 = ssub.s32 %s30, %s42
      %s44 = ssub.s32 %s31, %s38
      %s45 = sor.u32 %s43, %s44
      %p46 = scmp.eq.s32.totalorder %s45, 0
      %s48 = sadd.s32 %s47, 1
      %s49 = scalar_select %p46, %s47, %s48
      %p52 = pneg %p46
      %p53 = scmp.eq.s32.totalorder %s23, 1
      %p54 = por %p52, %p53
      %p55 = scmp.ne.s32.totalorder %s47, %s50
      %p56 = scmp.eq.s32.totalorder %s23, 0
      %p57 = por %p55, %p56
      %p58 = scmp.ne.s32.totalorder %s47, %s50
      %p59 = scmp.eq.s32.totalorder %s28, 1
      %p60 = por %p58, %p59
      %p61 = scmp.ne.s32.totalorder %s50, %s51
      %p62 = scmp.eq.s32.totalorder %s28, 0
      %p63 = por %p61, %p62
      %p64 = scmp.ne.s32.totalorder %s50, %s51
      %p65 = scmp.eq.s32.totalorder %s29, 1
      %p66 = por %p64, %p65
      %p68 = scmp.ne.s32.totalorder %s51, %s67
      %p69 = scmp.eq.s32.totalorder %s29, 0
      %p70 = por %p68, %p69
      %s71 = ssub.s32 %s30, %s42
      %s72 = ssub.s32 %s31, %s38
      %s73 = sor.u32 %s71, %s72
      %p74 = scmp.eq.s32.totalorder %s73, 0
      %s76 = sadd.s32 %s75, 1
      %s77 = scalar_select %p74, %s75, %s76
      %p80 = pneg %p74
      %p81 = scmp.eq.s32.totalorder %s23, 1
      %p82 = por %p80, %p81
      %p83 = scmp.ne.s32.totalorder %s75, %s78
      %p84 = scmp.eq.s32.totalorder %s23, 0
      %p85 = por %p83, %p84
      %p86 = scmp.ne.s32.totalorder %s75, %s78
      %p87 = scmp.eq.s32.totalorder %s28, 1
      %p88 = por %p86, %p87
      %p89 = scmp.ne.s32.totalorder %s78, %s79
      %p90 = scmp.eq.s32.totalorder %s28, 0
      %p91 = por %p89, %p90
      %p92 = scmp.ne.s32.totalorder %s78, %s79
      %p93 = scmp.eq.s32.totalorder %s29, 1
      %p94 = por %p92, %p93
      %p96 = scmp.ne.s32.totalorder %s79, %s95
      %p97 = scmp.eq.s32.totalorder %s29, 0
      %p98 = por %p96, %p97
      %s99 = ssub.s32 %s30, %s42
      %p100 = scmp.eq.s32.totalorder %s99, 0
      %s102 = sadd.s32 %s101, 1
      %s103 = scalar_select %p100, %s101, %s102
      %p106 = pneg %p100
      %p107 = scmp.eq.s32.totalorder %s23, 1
      %p108 = por %p106, %p107
      %p109 = scmp.ne.s32.totalorder %s101, %s104
      %p110 = scmp.eq.s32.totalorder %s23, 0
      %p111 = por %p109, %p110
      %p112 = scmp.ne.s32.totalorder %s101, %s104
      %p113 = scmp.eq.s32.totalorder %s28, 1
      %p114 = por %p112, %p113
      %p115 = scmp.ne.s32.totalorder %s104, %s105
      %p116 = scmp.eq.s32.totalorder %s28, 0
      %p117 = por %p115, %p116
      %p118 = scmp.ne.s32.totalorder %s104, %s105
      %p119 = scmp.eq.s32.totalorder %s29, 1
      %p120 = por %p118, %p119
      %p122 = scmp.ne.s32.totalorder %s105, %s121
      %p123 = scmp.eq.s32.totalorder %s29, 0
      %p124 = por %p122, %p123
      %s125 = ssub.s32 %s30, %s42
      %p126 = scmp.eq.s32.totalorder %s125, 0
      %s128 = sadd.s32 %s127, 1
      %s129 = scalar_select %p126, %s127, %s128
      %p132 = pneg %p126
      %p133 = scmp.eq.s32.totalorder %s23, 1
      %p134 = por %p132, %p133
      %p135 = scmp.ne.s32.totalorder %s127, %s130
      %p136 = scmp.eq.s32.totalorder %s23, 0
      %p137 = por %p135, %p136
      %p138 = scmp.ne.s32.totalorder %s127, %s130
      %p139 = scmp.eq.s32.totalorder %s28, 1
      %p140 = por %p138, %p139
      %p141 = scmp.ne.s32.totalorder %s130, %s131
      %p142 = scmp.eq.s32.totalorder %s28, 0
      %p143 = por %p141, %p142
      %p144 = scmp.ne.s32.totalorder %s130, %s131
      %p145 = scmp.eq.s32.totalorder %s29, 1
      %p146 = por %p144, %p145
      %p148 = scmp.ne.s32.totalorder %s131, %s147
      %p149 = scmp.eq.s32.totalorder %s29, 0
      %p150 = por %p148, %p149
      %s151 = ssub.s32 %s30, %s42
      %p152 = scmp.eq.s32.totalorder %s151, 0
      %s154 = sadd.s32 %s153, 1
      %s155 = scalar_select %p152, %s153, %s154
      %p158 = pneg %p152
      %p159 = scmp.eq.s32.totalorder %s23, 1
      %p160 = por %p158, %p159
      %p161 = scmp.ne.s32.totalorder %s153, %s156
      %p162 = scmp.eq.s32.totalorder %s23, 0
      %p163 = por %p161, %p162
      %p164 = scmp.ne.s32.totalorder %s153, %s156
      %p165 = scmp.eq.s32.totalorder %s28, 1
      %p166 = por %p164, %p165
      %p167 = scmp.ne.s32.totalorder %s156, %s157
      %p168 = scmp.eq.s32.totalorder %s28, 0
      %p169 = por %p167, %p168
      %p170 = scmp.ne.s32.totalorder %s156, %s157
      %p171 = scmp.eq.s32.totalorder %s29, 1
      %p172 = por %p170, %p171
      %p174 = scmp.ne.s32.totalorder %s157, %s173
      %p175 = scmp.eq.s32.totalorder %s29, 0
      %p176 = por %p174, %p175
      %p177 = scmp.le.s32.totalorder 1, %s23
      %p178 = scmp.lt.s32.totalorder %s23, 3
      %p179 = pnand %p177, %p178
      %p180 = pneg %p179
      // Predicated region
      $region9: #{tpu_custom_call.1} parent=5 // pred_check
        _
      $region10: #{tpu_custom_call.1} parent=5 // pred_check_branch
        %182 = sbr.rel (%p179) target = $region12
      $region11: #{tpu_custom_call.1} parent=5 // pred_region
        %s183 = ssub.s32 %s23, 1
      $region12: #{tpu_custom_call.1} parent=5 // pred_fallthru
        _
      %p184 = scmp.lt.s32.totalorder %s23, 2
      // Predicated region
      $region13: #{tpu_custom_call.1} parent=5 // pred_check
        %p185 = pneg %p184
      $region14: #{tpu_custom_call.1} parent=5 // pred_check_branch
        %187 = sbr.rel (%p185) target = $region16
      $region15: #{tpu_custom_call.1} parent=5 // pred_region
        // Predicated region
        $region17: #{tpu_custom_call.1} parent=15 // pred_check
          %p188 = pneg %p57
        $region18: #{tpu_custom_call.1} parent=15 // pred_check_branch
          %190 = sbr.rel (%p188) target = $region20
        $region19: #{tpu_custom_call.1} parent=15 // pred_region
          %s191 = sand.u32 %s47, 1
          %s192 = scalar_lea.sflag [#allocation3], %s191
          %s193 = sand.u32 %s47, 1
          %s194 = smul.addr %s193, 2
          %s195 = scalar_lea.vmem [#allocation2], %s194
          %s197 = ssub.s32 32, 32
          %198 = vsyncadd %s192, %s197
          %s199 = sadd.s32 %s31, 1
          %s200 = smul.addr %s30, 2
          %s201 = sadd.s32 %s199, %s200
          %s202 = smul.addr %s201, 32
          %s203 = scalar_lea.hbm %s0, %s202
          %s205 = sshll.u32 %s195, 4
          %s206 = int_to_ptr.vmem [resolvable:$true] %s205
          %208 = dma.hbm_to_vmem [thread:$0]  %s203, 32, %s206, %s192
        $region20: #{tpu_custom_call.1} parent=15 // pred_fallthru
          _
        // Predicated region
        $region21: #{tpu_custom_call.1} parent=15 // pred_check
          %p209 = pneg %p85
        $region22: #{tpu_custom_call.1} parent=15 // pred_check_branch
          %211 = sbr.rel (%p209) target = $region24
        $region23: #{tpu_custom_call.1} parent=15 // pred_region
          %s212 = sand.u32 %s75, 1
          %s213 = scalar_lea.sflag [#allocation6], %s212
          %s214 = sand.u32 %s75, 1
          %s215 = smul.addr %s214, 2
          %s216 = scalar_lea.vmem [#allocation5], %s215
          %s218 = ssub.s32 32, 32
          %219 = vsyncadd %s213, %s218
          %s220 = sadd.s32 %s31, %s30
          %s221 = smul.addr %s220, 32
          %s222 = scalar_lea.hbm %s1, %s221
          %s224 = sshll.u32 %s216, 4
          %s225 = int_to_ptr.vmem [resolvable:$true] %s224
          %227 = dma.hbm_to_vmem [thread:$0]  %s222, 32, %s225, %s213
        $region24: #{tpu_custom_call.1} parent=15 // pred_fallthru
          _
      $region16: #{tpu_custom_call.1} parent=5 // pred_fallthru
        _
      %p228 = scmp.le.s32.totalorder 1, %s23
      %p229 = scmp.lt.s32.totalorder %s23, 3
      %p230 = pnand %p228, %p229
      %p231 = pneg %p230
      // Predicated region
      $region25: #{tpu_custom_call.1} parent=5 // pred_check
        _
      $region26: #{tpu_custom_call.1} parent=5 // pred_check_branch
        %233 = sbr.rel (%p230) target = $region28
      $region27: #{tpu_custom_call.1} parent=5 // pred_region
        %s234 = ssub.s32 %s23, 1
        %s235 = sand.u32 %s50, 1
        %s236 = scalar_lea.sflag [#allocation3], %s235
        %s237 = sand.u32 %s50, 1
        %s238 = smul.addr %s237, 2
        %s239 = scalar_lea.vmem [#allocation2], %s238
        // Predicated region
        $region29: #{tpu_custom_call.1} parent=27 // pred_check
          %p240 = pneg %p63
        $region30: #{tpu_custom_call.1} parent=27 // pred_check_branch
          %242 = sbr.rel (%p240) target = $region32
        $region31: #{tpu_custom_call.1} parent=27 // pred_region
          %243 = dma.done %s236, 32
        $region32: #{tpu_custom_call.1} parent=27 // pred_fallthru
          _
        %s244 = sand.u32 %s78, 1
        %s245 = scalar_lea.sflag [#allocation6], %s244
        %s246 = sand.u32 %s78, 1
        %s247 = smul.addr %s246, 2
        %s248 = scalar_lea.vmem [#allocation5], %s247
        // Predicated region
        $region33: #{tpu_custom_call.1} parent=27 // pred_check
          %p249 = pneg %p91
        $region34: #{tpu_custom_call.1} parent=27 // pred_check_branch
          %251 = sbr.rel (%p249) target = $region36
        $region35: #{tpu_custom_call.1} parent=27 // pred_region
          %252 = dma.done %s245, 32
        $region36: #{tpu_custom_call.1} parent=27 // pred_fallthru
          _
        %s253 = sand.u32 %s50, 1
        %s254 = scalar_lea.sflag [#allocation3], %s253
        %s255 = sand.u32 %s50, 1
        %s256 = smul.addr %s255, 2
        %s257 = scalar_lea.vmem [#allocation2], %s256
        %p258 = pneg %p63
        %p259 = pneg %p60
        %s260 = sand.u32 %s78, 1
        %s261 = scalar_lea.sflag [#allocation6], %s260
        %s262 = sand.u32 %s78, 1
        %s263 = smul.addr %s262, 2
        %s264 = scalar_lea.vmem [#allocation5], %s263
        %p265 = pneg %p91
        %p266 = pneg %p88
        %p267 = pneg %p117
        %p268 = pneg %p114
        %s269 = sand.u32 %s104, 1
        %s270 = scalar_lea.sflag [#allocation4], %s269
        %s271 = sand.u32 %s104, 1
        %s272 = smul.addr %s271, 2
        %s273 = scalar_lea.vmem [#allocation7], %s272
        %p274 = pneg %p143
        %p275 = pneg %p140
        %s276 = sand.u32 %s28, 1
        %s277 = scalar_lea.sflag [#allocation9], %s276
        %s278 = sand.u32 %s130, 1
        %s279 = smul.addr %s278, 2
        %s280 = scalar_lea.vmem [#allocation8], %s279
        %p281 = pneg %p169
        %p282 = pneg %p166
        %s283 = sand.u32 %s28, 1
        %s284 = scalar_lea.sflag [#allocation9], %s283
        %s285 = sand.u32 %s156, 1
        %s286 = smul.addr %s285, 2
        %s287 = scalar_lea.vmem [#allocation10], %s286
        %p288 = scmp.eq.s32.totalorder %s33, 0
        // Predicated region
        $region37: #{tpu_custom_call.1} parent=27 // pred_check
          %p289 = pneg %p288
        $region38: #{tpu_custom_call.1} parent=27 // pred_check_branch
          %291 = sbr.rel (%p289) target = $region40
        $region39: #{tpu_custom_call.1} parent=27 // pred_region
          %292 = vst [vmem:[%s273] sm:$0x3] 0.0
          %293 = vst [vmem:[%s280] sm:$0x3] 0.0
          %294 = vst [vmem:[%s287] sm:$0x3] 0.0
        $region40: #{tpu_custom_call.1} parent=27 // pred_fallthru
          _
        %v295 = vld [vmem:[%s239] sm:$0x3]
        %v296 = vld [vmem:[%s248] sm:$0x3]
        %vm297 = vcmp.eq.s32.totalorder %v296, 1
        %v298 = vsel %vm297, 1, 0
        %v299 = vcvt.s32.f32 %v298
        %v300 = vmul.f32 %v295, %v299
        %v301 = vld [vmem:[%s273] sm:$0x3]
        %v302 = vadd.f32 %v301, %v300
        %303 = vst [vmem:[%s273] sm:$0x3] %v302
        %v304 = vld [vmem:[%s280] sm:$0x3]
        %v305 = vadd.f32 %v295, %v299
        %v306 = vadd.f32 %v304, %v305
        %307 = vst [vmem:[%s280] sm:$0x3] %v306
        %v308 = vld [vmem:[%s287] sm:$0x3]
        %v309 = vadd.f32 %v308, %v299
        %310 = vst [vmem:[%s287] sm:$0x3] %v309
        %s311 = sand.u32 %s104, 1
        %s312 = scalar_lea.sflag [#allocation4], %s311
        %s313 = sand.u32 %s104, 1
        %s314 = smul.addr %s313, 2
        %s315 = scalar_lea.vmem [#allocation7], %s314
        %s316 = sand.u32 %s28, 1
        %s317 = scalar_lea.sflag [#allocation9], %s316
        %s318 = sand.u32 %s130, 1
        %s319 = smul.addr %s318, 2
        %s320 = scalar_lea.vmem [#allocation8], %s319
        %s321 = sand.u32 %s28, 1
        %s322 = scalar_lea.sflag [#allocation9], %s321
        %s323 = sand.u32 %s156, 1
        %s324 = smul.addr %s323, 2
        %s325 = scalar_lea.vmem [#allocation10], %s324
        // Predicated region
        $region41: #{tpu_custom_call.1} parent=27 // pred_check
          %p326 = pneg %p114
        $region42: #{tpu_custom_call.1} parent=27 // pred_check_branch
          %328 = sbr.rel (%p326) target = $region44
        $region43: #{tpu_custom_call.1} parent=27 // pred_region
          %s330 = ssub.s32 32, 32
          %331 = vsyncadd %s312, %s330
          %s332 = smul.addr %s32, 32
          %s333 = scalar_lea.hbm %s2, %s332
          %s335 = sshll.u32 %s315, 4
          %s336 = int_to_ptr.vmem [resolvable:$true] %s335
          %338 = dma.vmem_to_hbm [thread:$0]  %s336, 32, %s333, %s312
        $region44: #{tpu_custom_call.1} parent=27 // pred_fallthru
          _
        // Predicated region
        $region45: #{tpu_custom_call.1} parent=27 // pred_check
          %p339 = pneg %p140
        $region46: #{tpu_custom_call.1} parent=27 // pred_check_branch
          %341 = sbr.rel (%p339) target = $region48
        $region47: #{tpu_custom_call.1} parent=27 // pred_region
          %s343 = ssub.s32 32, 32
          %344 = vsyncadd %s317, %s343
          %s345 = smul.addr %s32, 32
          %s346 = scalar_lea.hbm %s3, %s345
          %s348 = sshll.u32 %s320, 4
          %s349 = int_to_ptr.vmem [resolvable:$true] %s348
          %351 = dma.vmem_to_hbm [thread:$0]  %s349, 32, %s346, %s317
        $region48: #{tpu_custom_call.1} parent=27 // pred_fallthru
          _
        // Predicated region
        $region49: #{tpu_custom_call.1} parent=27 // pred_check
          %p352 = pneg %p166
        $region50: #{tpu_custom_call.1} parent=27 // pred_check_branch
          %354 = sbr.rel (%p352) target = $region52
        $region51: #{tpu_custom_call.1} parent=27 // pred_region
          %s356 = ssub.s32 32, 32
          %357 = vsyncadd %s322, %s356
          %s358 = smul.addr %s32, 32
          %s359 = scalar_lea.hbm %s4, %s358
          %s361 = sshll.u32 %s325, 4
          %s362 = int_to_ptr.vmem [resolvable:$true] %s361
          %364 = dma.vmem_to_hbm [thread:$0]  %s362, 32, %s359, %s322
        $region52: #{tpu_custom_call.1} parent=27 // pred_fallthru
          _
      $region28: #{tpu_custom_call.1} parent=5 // pred_fallthru
        _
      %p365 = scmp.le.s32.totalorder 2, %s23
      // Predicated region
      $region53: #{tpu_custom_call.1} parent=5 // pred_check
        %p366 = pneg %p365
      $region54: #{tpu_custom_call.1} parent=5 // pred_check_branch
        %368 = sbr.rel (%p366) target = $region56
      $region55: #{tpu_custom_call.1} parent=5 // pred_region
        %s369 = ssub.s32 %s23, 2
        // Predicated region
        $region57: #{tpu_custom_call.1} parent=55 // pred_check
          %p370 = pneg %p120
        $region58: #{tpu_custom_call.1} parent=55 // pred_check_branch
          %372 = sbr.rel (%p370) target = $region60
        $region59: #{tpu_custom_call.1} parent=55 // pred_region
          %s373 = sand.u32 %s105, 1
          %s374 = scalar_lea.sflag [#allocation4], %s373
          %s375 = sand.u32 %s105, 1
          %s376 = smul.addr %s375, 2
          %s377 = scalar_lea.vmem [#allocation7], %s376
          %378 = dma.done %s374, 32
        $region60: #{tpu_custom_call.1} parent=55 // pred_fallthru
          _
        // Predicated region
        $region61: #{tpu_custom_call.1} parent=55 // pred_check
          %p379 = pneg %p146
        $region62: #{tpu_custom_call.1} parent=55 // pred_check_branch
          %381 = sbr.rel (%p379) target = $region64
        $region63: #{tpu_custom_call.1} parent=55 // pred_region
          %s382 = sand.u32 %s29, 1
          %s383 = scalar_lea.sflag [#allocation9], %s382
          %s384 = sand.u32 %s131, 1
          %s385 = smul.addr %s384, 2
          %s386 = scalar_lea.vmem [#allocation8], %s385
          %387 = dma.done %s383, 32
        $region64: #{tpu_custom_call.1} parent=55 // pred_fallthru
          _
        // Predicated region
        $region65: #{tpu_custom_call.1} parent=55 // pred_check
          %p388 = pneg %p172
        $region66: #{tpu_custom_call.1} parent=55 // pred_check_branch
          %390 = sbr.rel (%p388) target = $region68
        $region67: #{tpu_custom_call.1} parent=55 // pred_region
          %s391 = sand.u32 %s29, 1
          %s392 = scalar_lea.sflag [#allocation9], %s391
          %s393 = sand.u32 %s157, 1
          %s394 = smul.addr %s393, 2
          %s395 = scalar_lea.vmem [#allocation10], %s394
          %396 = dma.done %s392, 32
        $region68: #{tpu_custom_call.1} parent=55 // pred_fallthru
          _
      $region56: #{tpu_custom_call.1} parent=5 // pred_fallthru
        _
    $region6: #{tpu_custom_call.1} parent=1 // loop_footer
      %s27 = sadd.s32 1, %s23
    $region7: #{tpu_custom_call.1} parent=1 // loop_footer_branch
      %22 = sbr.rel target = $region3
    $region8: #{tpu_custom_call.1} parent=1 // loop_exit
      _
    %397 = vsyncpa [#allocation3], 1
    %s398 = scalar_lea.sflag [#allocation3], 1
    %399 = vsyncpa %s398, 1
    %400 = vsyncpa [#allocation6], 1
    %s401 = scalar_lea.sflag [#allocation6], 1
    %402 = vsyncpa %s401, 1
    %403 = vsyncpa [#allocation4], 1
    %s404 = scalar_lea.sflag [#allocation4], 1
    %405 = vsyncpa %s404, 1
    %406 = vsyncpa [#allocation9], 1
    %s407 = scalar_lea.sflag [#allocation9], 1
    %408 = vsyncpa %s407, 1

</llo_original>
